<compile_context>
chip_gen: v5e
topology: v5e:2x2
jax: 0.10.0
libtpu: 0.0.40
codegen_flags: <defaults>
</compile_context>

<pallas_src>
import jax
import jax.numpy as jnp
from jax.experimental import pallas as pl
from jax.experimental.pallas import tpu as pltpu


def _round_up(x, m):
    return ((x + m - 1) // m) * m


def _node_embedding_kernel(atom_ref, rep_ref, w_ref, emb_ref):
    """Per tile: emb[row, g*D:(g+1)*D] = W[atom[row, g]] + bias  (lane-dense select chain).

    atom_ref: (tile_rows, pack) int32      -- `pack` nodes packed per row (streamed)
    rep_ref : (pack, pack*D) float32       -- 0/1 lane-replication matrix (resident)
    w_ref   : (T, pack*D) float32          -- W[k]+bias tiled into each D quadrant (resident)
    emb_ref : (tile_rows, pack*D) float32  -- lane-dense packed embedding (pack*D == 128)
    """
    t = w_ref.shape[0]

    # Lane-replicate atom ids into the packed 128-lane layout on the (idle) MXU:
    #   atom_lane[r, g*D + j] = atom[r, g]
    # Exact at any matmul precision: each output lane is a single product with a 0/1 matrix.
    atom_f = atom_ref[...].astype(jnp.float32)                      # (rows, pack)
    atom_lane = jnp.dot(atom_f, rep_ref[...],
                        preferred_element_type=jnp.float32)         # (rows, pack*D)

    w = w_ref[...]                                                  # (T, pack*D), bias folded in
    acc = jnp.zeros(emb_ref.shape, jnp.float32)
    # T-step compare/select chain on full-width vregs (VPU).  Exactly one k matches per
    # node; out-of-range / padding sentinel (-1) matches nothing -> stays 0 (discarded).
    for k in range(t):
        acc = jnp.where(atom_lane == k, w[k:k + 1, :], acc)
    emb_ref[...] = acc.astype(emb_ref.dtype)


def node_embedding_network(node_atom, weight, bias, *, tile_nodes=None,
                           out_dtype=jnp.float32):
    """node_atom: (N,) int; weight: (T, D) f32; bias: (D,) f32.

    Returns (node_embedding (N, D), node_attr (N, T), node_atom_onehot (N, T)),
    matching NodeEmbeddingNetwork.forward (node_attr aliases the one-hot).
    """
    n = node_atom.shape[0]
    t, d = weight.shape
    atom = node_atom.astype(jnp.int32)

    # Lane-dense packing: D=32 < 128 lanes, so pack 128//D nodes per packed output row.
    pack = (128 // d) if (d <= 128 and 128 % d == 0) else 1
    lane_w = pack * d

    # Node tile: multiple of 8*pack (8 sublanes of packed rows).
    node_quantum = 8 * pack
    # Cap tiles so the f32 output block stays ~2 MiB (VMEM-safe on v5e/v6e/v7x at default
    # scoped limits, with double-buffering).
    vmem_cap_nodes = max(node_quantum,
                         ((2 << 20) // (4 * d)) // node_quantum * node_quantum)
    if tile_nodes is None:
        # Big tiles to amortize per-grid-step overhead, but keep >= 4 grid steps so the
        # v7x megacore (parallel node axis over 2 TCs) gets >= 2 steps per core.
        tile_nodes = min(vmem_cap_nodes,
                         _round_up(pl.cdiv(max(n, 1), 4), node_quantum))
    tile_nodes = max(node_quantum, _round_up(int(tile_nodes), node_quantum))
    tile_rows = tile_nodes // pack

    n_pad = _round_up(n, tile_nodes)
    rows_pad = n_pad // pack
    grid = (rows_pad // tile_rows,)

    # Pad with -1: out-of-range atom matches no k -> padded rows produce zeros and are
    # sliced off below.
    atom_padded = jnp.full((n_pad,), -1, jnp.int32).at[:n].set(atom)
    atom_packed = atom_padded.reshape(rows_pad, pack)

    # Resident constants: replication matrix and quadrant-tiled (W + bias).
    lane_idx = jnp.arange(lane_w, dtype=jnp.int32)
    group_idx = jnp.arange(pack, dtype=jnp.int32)[:, None]
    rep = (lane_idx[None, :] // d == group_idx).astype(jnp.float32)          # (pack, lane_w)
    w_tiled = jnp.tile(weight.astype(jnp.float32) +
                       bias.astype(jnp.float32)[None, :], (1, pack))         # (T, lane_w)

    cost = pl.CostEstimate(
        flops=2 * n_pad * t * d,
        transcendentals=0,
        bytes_accessed=(n_pad * 4                      # atom ids (read)
                        + n_pad * d * 4                # packed embedding (write)
                        + pack * lane_w * 4            # rep (read once)
                        + t * lane_w * 4),             # tiled weight (read once)
    )

    emb_packed = pl.pallas_call(
        _node_embedding_kernel,
        out_shape=jax.ShapeDtypeStruct((rows_pad, lane_w), out_dtype),
        grid=grid,
        in_specs=[
            pl.BlockSpec((tile_rows, pack), lambda i: (i, 0)),   # streamed node tiles
            pl.BlockSpec((pack, lane_w), lambda i: (0, 0)),      # resident replication matrix
            pl.BlockSpec((t, lane_w), lambda i: (0, 0)),         # resident tiled weight+bias
        ],
        out_specs=pl.BlockSpec((tile_rows, lane_w), lambda i: (i, 0)),
        compiler_params=pltpu.CompilerParams(
            dimension_semantics=("parallel",),                   # megacore on v7x
        ),
        cost_estimate=cost,
    )(atom_packed, rep, w_tiled)

    # Quadrant layout -> row-major reshape is free (contiguous), then slice off padding.
    node_embedding = emb_packed.reshape(n_pad, d)[:n]

    # One-hot / node_attr: trivially cheap, produced in plain XLA; a (N, 5) Pallas output
    # would be ~96% lane padding with masked stores.
    node_atom_onehot = jax.nn.one_hot(atom, t, dtype=jnp.float32)
    node_attr = node_atom_onehot
    return node_embedding, node_attr, node_atom_onehot


if __name__ == "__main__":
    MAX_ATOM_TYPE = 5   # "5x0e" input irreps
    EMBED_DIM = 32      # "32x0e" embedding irreps (scalar-only)
    N_NODES = 8

    key = jax.random.PRNGKey(0)
    k_w, k_b, k_a, k_a2 = jax.random.split(key, 4)

    # LinearRS-style init (1/sqrt(fan_in)) then the __init__ scaling by sqrt(T).
    weight = jax.random.normal(k_w, (MAX_ATOM_TYPE, EMBED_DIM), jnp.float32)
    weight = weight * (1.0 / jnp.sqrt(jnp.float32(MAX_ATOM_TYPE))) * (MAX_ATOM_TYPE ** 0.5)
    # LinearRS initializes bias to zero; a nonzero bias here exercises the bias add.
    bias = jax.random.normal(k_b, (EMBED_DIM,), jnp.float32) * 0.1

    node_atom = jax.random.randint(k_a, (N_NODES,), 0, MAX_ATOM_TYPE, jnp.int32)

    emb, node_attr, onehot = node_embedding_network(node_atom, weight, bias)
    jax.block_until_ready((emb, node_attr, onehot))

    # Reference check in plain JAX.
    onehot_ref = jax.nn.one_hot(node_atom, MAX_ATOM_TYPE, dtype=jnp.float32)
    emb_ref = onehot_ref @ weight + bias
    assert emb.shape == (N_NODES, EMBED_DIM)
    assert onehot.shape == (N_NODES, MAX_ATOM_TYPE)
    assert jnp.allclose(onehot, onehot_ref), "one-hot mismatch"
    assert jnp.allclose(node_attr, onehot_ref), "node_attr mismatch"
    assert jnp.allclose(emb, emb_ref, atol=1e-5), "embedding mismatch"

    # Also exercise the multi-tile (grid > 1) + padding path at a modest size.
    N2 = 300
    node_atom2 = jax.random.randint(k_a2, (N2,), 0, MAX_ATOM_TYPE, jnp.int32)
    emb2, _, onehot2 = node_embedding_network(node_atom2, weight, bias, tile_nodes=128)
    jax.block_until_ready((emb2, onehot2))
    emb2_ref = jax.nn.one_hot(node_atom2, MAX_ATOM_TYPE, dtype=jnp.float32) @ weight + bias
    assert jnp.allclose(emb2, emb2_ref, atol=1e-5), "tiled embedding mismatch"
    assert jnp.allclose(onehot2, jax.nn.one_hot(node_atom2, MAX_ATOM_TYPE, dtype=jnp.float32))

    # And the default (auto) tile sizing path with a larger N.
    N3 = 5000
    node_atom3 = jax.random.randint(jax.random.PRNGKey(3), (N3,), 0, MAX_ATOM_TYPE, jnp.int32)
    emb3, _, _ = node_embedding_network(node_atom3, weight, bias)
    jax.block_until_ready(emb3)
    emb3_ref = jax.nn.one_hot(node_atom3, MAX_ATOM_TYPE, dtype=jnp.float32) @ weight + bias
    assert jnp.allclose(emb3, emb3_ref, atol=1e-5), "auto-tiled embedding mismatch"

    print("KERNEL_OK")
</pallas_src>

<mosaic_0001>
module attributes {stable_mosaic.version = 11 : i64} {
  func.func @_node_embedding_kernel(%arg0: i32, %arg1: memref<8x4xi32, #tpu.memory_space<vmem>>, %arg2: memref<4x128xf32, #tpu.memory_space<vmem>>, %arg3: memref<5x128xf32, #tpu.memory_space<vmem>>, %arg4: memref<8x128xf32, #tpu.memory_space<vmem>>) attributes {dimension_semantics = [#tpu.dimension_semantics<parallel>], iteration_bounds = array<i64: 1>, scalar_prefetch = 0 : i64, scratch_operands = 0 : i64, tpu.core_type = #tpu.core_type<tc>, window_params = [{transform_indices = @transform_0, window_bounds = array<i64: 8, 4>}, {pipeline_mode = #tpu.pipeline_mode<synchronous>, transform_indices = @transform_1, window_bounds = array<i64: 4, 128>}, {pipeline_mode = #tpu.pipeline_mode<synchronous>, transform_indices = @transform_2, window_bounds = array<i64: 5, 128>}, {transform_indices = @transform_3, window_bounds = array<i64: 8, 128>}]} {
    %c0 = arith.constant 0 : index
    %c0_0 = arith.constant 0 : index
    %0 = vector.load %arg1[%c0, %c0_0] : memref<8x4xi32, #tpu.memory_space<vmem>>, vector<8x4xi32>
    %1 = arith.sitofp %0 : vector<8x4xi32> to vector<8x4xf32>
    %c0_1 = arith.constant 0 : index
    %c0_2 = arith.constant 0 : index
    %2 = vector.load %arg2[%c0_1, %c0_2] : memref<4x128xf32, #tpu.memory_space<vmem>>, vector<4x128xf32>
    %cst = arith.constant dense<0.000000e+00> : vector<8x128xf32>
    %3 = tpu.matmul %1, %2, %cst {dimension_numbers = #tpu.dot_dimension_numbers<[1], [0], [0], [1], [0, 0, 1, 1], [], []>} : vector<8x4xf32>, vector<4x128xf32>, vector<8x128xf32> -> vector<8x128xf32>
    %c0_3 = arith.constant 0 : index
    %c0_4 = arith.constant 0 : index
    %4 = vector.load %arg3[%c0_3, %c0_4] : memref<5x128xf32, #tpu.memory_space<vmem>>, vector<5x128xf32>
    %cst_5 = arith.constant 0.000000e+00 : f32
    %5 = vector.broadcast %cst_5 : f32 to vector<8x128xf32>
    %cst_6 = arith.constant 0.000000e+00 : f32
    %6 = vector.broadcast %cst_6 : f32 to vector<8x128xf32>
    %7 = arith.cmpf oeq, %3, %6 : vector<8x128xf32>
    %8 = vector.extract_strided_slice %4 {offsets = [0, 0], sizes = [1, 128], strides = [1, 1]} : vector<5x128xf32> to vector<1x128xf32>
    %9 = vector.shape_cast %8 : vector<1x128xf32> to vector<1x128xf32>
    %10 = vector.broadcast %9 : vector<1x128xf32> to vector<8x128xf32>
    %11 = arith.select %7, %10, %5 : vector<8x128xi1>, vector<8x128xf32>
    %cst_7 = arith.constant 1.000000e+00 : f32
    %12 = vector.broadcast %cst_7 : f32 to vector<8x128xf32>
    %13 = arith.cmpf oeq, %3, %12 : vector<8x128xf32>
    %14 = vector.extract_strided_slice %4 {offsets = [1, 0], sizes = [1, 128], strides = [1, 1]} : vector<5x128xf32> to vector<1x128xf32>
    %15 = vector.shape_cast %14 : vector<1x128xf32> to vector<1x128xf32>
    %16 = vector.broadcast %15 : vector<1x128xf32> to vector<8x128xf32>
    %17 = arith.select %13, %16, %11 : vector<8x128xi1>, vector<8x128xf32>
    %cst_8 = arith.constant 2.000000e+00 : f32
    %18 = vector.broadcast %cst_8 : f32 to vector<8x128xf32>
    %19 = arith.cmpf oeq, %3, %18 : vector<8x128xf32>
    %20 = vector.extract_strided_slice %4 {offsets = [2, 0], sizes = [1, 128], strides = [1, 1]} : vector<5x128xf32> to vector<1x128xf32>
    %21 = vector.shape_cast %20 : vector<1x128xf32> to vector<1x128xf32>
    %22 = vector.broadcast %21 : vector<1x128xf32> to vector<8x128xf32>
    %23 = arith.select %19, %22, %17 : vector<8x128xi1>, vector<8x128xf32>
    %cst_9 = arith.constant 3.000000e+00 : f32
    %24 = vector.broadcast %cst_9 : f32 to vector<8x128xf32>
    %25 = arith.cmpf oeq, %3, %24 : vector<8x128xf32>
    %26 = vector.extract_strided_slice %4 {offsets = [3, 0], sizes = [1, 128], strides = [1, 1]} : vector<5x128xf32> to vector<1x128xf32>
    %27 = vector.shape_cast %26 : vector<1x128xf32> to vector<1x128xf32>
    %28 = vector.broadcast %27 : vector<1x128xf32> to vector<8x128xf32>
    %29 = arith.select %25, %28, %23 : vector<8x128xi1>, vector<8x128xf32>
    %cst_10 = arith.constant 4.000000e+00 : f32
    %30 = vector.broadcast %cst_10 : f32 to vector<8x128xf32>
    %31 = arith.cmpf oeq, %3, %30 : vector<8x128xf32>
    %32 = vector.extract_strided_slice %4 {offsets = [4, 0], sizes = [1, 128], strides = [1, 1]} : vector<5x128xf32> to vector<1x128xf32>
    %33 = vector.shape_cast %32 : vector<1x128xf32> to vector<1x128xf32>
    %34 = vector.broadcast %33 : vector<1x128xf32> to vector<8x128xf32>
    %35 = arith.select %31, %34, %29 : vector<8x128xi1>, vector<8x128xf32>
    %c0_11 = arith.constant 0 : index
    %c0_12 = arith.constant 0 : index
    %36 = vector.load %arg4[%c0_11, %c0_12] : memref<8x128xf32, #tpu.memory_space<vmem>>, vector<8x128xf32>
    tpu.vector_store %arg4[%c0_11, %c0_12], %35 {strides = array<i32>} : memref<8x128xf32, #tpu.memory_space<vmem>>, vector<8x128xf32>,
    return
  }
  func.func @transform_0(%arg0: i32) -> (i32, i32) {
    %c0_i32 = arith.constant 0 : i32
    %c0_i32_0 = arith.constant 0 : i32
    return %arg0, %c0_i32 : i32, i32
  }
  func.func @transform_1(%arg0: i32) -> (i32, i32) {
    %c0_i32 = arith.constant 0 : i32
    %c0_i32_0 = arith.constant 0 : i32
    %c0_i32_1 = arith.constant 0 : i32
    return %c0_i32, %c0_i32_0 : i32, i32
  }
  func.func @transform_2(%arg0: i32) -> (i32, i32) {
    %c0_i32 = arith.constant 0 : i32
    %c0_i32_0 = arith.constant 0 : i32
    %c0_i32_1 = arith.constant 0 : i32
    return %c0_i32, %c0_i32_0 : i32, i32
  }
  func.func @transform_3(%arg0: i32) -> (i32, i32) {
    %c0_i32 = arith.constant 0 : i32
    %c0_i32_0 = arith.constant 0 : i32
    return %arg0, %c0_i32 : i32, i32
  }
}

</mosaic_0001>

<llo_original>
// kernel: tpu_custom_call.1
$region0: #{tpu_custom_call.1}
  #allocation0 [shape = 'u32[]', space=smem, size = 0x4, offset = 0x4, fixed_abs, tag = 'smem constant byte address 0x4 - core index']
  #allocation1 [shape = 'u32[72,128]{1,0:T(1,128)}', space=vmem, size = 0x9000, scoped, tag = 'internal scratch']
  %s0 = inlined_call_operand.vmem [shape: s32[8,4], index: 0, kind: input, shape index: {}]
  %s1 = inlined_call_operand.vmem [shape: f32[4,128], index: 1, kind: input, shape index: {}]
  %s2 = inlined_call_operand.vmem [shape: f32[5,128], index: 2, kind: input, shape index: {}]
  %s3 = inlined_call_operand.hbm [shape: f32[8,128], index: 3, kind: output, shape index: {}]
  %s4 = sld [smem:[#allocation0]]
  $region22: #{tpu_custom_call.1} parent=0
    _
  %s6 = ssub.s32 1, %s4
  %s7 = scalar_select 0, %s6, %s4
  $region1: #{tpu_custom_call.1} parent=0
    #allocation2 [shape = 'u8[4096]{0}', space=vmem, size = 0x1000, scoped, tag = 'output window, operand 0, single buffered']
    #allocation3 [shape = 's32[1]{0}', space=sflag, size = 0x4, scoped, tag = 'scoped memory for tpu_custom_call.1']
    %8 = vsyncpa [#allocation3], 0
    // Predicated region
    $region2: #{tpu_custom_call.1} parent=1 // pred_check
      _
    $region3: #{tpu_custom_call.1} parent=1 // pred_check_branch
      %10 = sbr.rel (0) target = $region5
    $region4: #{tpu_custom_call.1} parent=1 // pred_region
      _
    $region5: #{tpu_custom_call.1} parent=1 // pred_fallthru
      _
    // Predicated region
    $region6: #{tpu_custom_call.1} parent=1 // pred_check
      _
    $region7: #{tpu_custom_call.1} parent=1 // pred_check_branch
      %12 = sbr.rel (0) target = $region9
    $region8: #{tpu_custom_call.1} parent=1 // pred_region
      _
    $region9: #{tpu_custom_call.1} parent=1 // pred_fallthru
      _
    // Predicated region
    $region10: #{tpu_custom_call.1} parent=1 // pred_check
      _
    $region11: #{tpu_custom_call.1} parent=1 // pred_check_branch
      %14 = sbr.rel (0) target = $region13
    $region12: #{tpu_custom_call.1} parent=1 // pred_region
      _
    $region13: #{tpu_custom_call.1} parent=1 // pred_fallthru
      _
    %v15 = vld [vmem:[%s0] sm:$0xff]
    %v16 = vcvt.s32.f32 %v15
    %v17 = vld [vmem:[%s1] sm:$0xf]
    %vm18 = vcmask 31744
    %v20 = vsel %vm18, %v16, 0
    %vm22 = vcmask 1043456
    %v24 = vsel %vm22, %v17, 0
    %26 = vmatpush.msra.mxu0 0.0
    %27 = vmatpush.msra.mxu0 0.0
    %28 = vmatpush.msra.mxu0 0.0
    %29 = vmatpush.msra.mxu0 0.0
    %30 = vmatpush.msra.mxu0 0.0
    %31 = vmatpush.msra.mxu0 0.0
    %32 = vmatpush.msra.mxu0 0.0
    %33 = vmatpush.msra.mxu0 0.0
    %34 = vmatpush.msra.mxu0 0.0
    %35 = vmatpush.msra.mxu0 0.0
    %36 = vmatpush.msra.mxu0 0.0
    %37 = vmatpush.msra.mxu0 0.0
    %38 = vmatpush.msra.mxu0 0.0
    %39 = vmatpush.msra.mxu0 0.0
    %40 = vmatpush.msra.mxu0 0.0
    %41 = vmatpush.msra.mxu0 %v24
    %42 = vmatmul.f32.gmra.mxu0 %v20
    %v43 = vpop.f32.mrf.mxu0
    %v44 = vadd.f32 0.0, %v43
    %45 = vdwg.mxu0
    %v46 = vld [vmem:[%s2] sm:$0x1f]
    %vm47 = vcmp.eq.f32.partialorder %v44, 0.0
    %v48 = vperm.slane %v46, 0
    %v49 = vsel %vm47, %v48, 0.0
    %vm50 = vcmp.eq.f32.partialorder %v44, 1.0
    %v51 = vperm.slane %v46, 1
    %v52 = vsel %vm50, %v51, %v49
    %vm53 = vcmp.eq.f32.partialorder %v44, 2.0
    %v54 = vperm.slane %v46, 2
    %v55 = vsel %vm53, %v54, %v52
    %vm56 = vcmp.eq.f32.partialorder %v44, 3.0
    %v57 = vperm.slane %v46, 3
    %v58 = vsel %vm56, %v57, %v55
    %vm59 = vcmp.eq.f32.partialorder %v44, 4.0
    %v60 = vperm.slane %v46, 4
    %v61 = vsel %vm59, %v60, %v58
    %62 = vst [vmem:[#allocation2] sm:$0xff] %v61
    // Predicated region
    $region14: #{tpu_custom_call.1} parent=1 // pred_check
      _
    $region15: #{tpu_custom_call.1} parent=1 // pred_check_branch
      %64 = sbr.rel (0) target = $region17
    $region16: #{tpu_custom_call.1} parent=1 // pred_region
      %66 = vsyncadd [#allocation3], 0
      %s68 = sshll.u32 [#allocation2], 4
      %s69 = int_to_ptr.vmem [resolvable:$true] %s68
      %s70 = sshll.u32 %s3, 4
      %s71 = int_to_ptr.hbm [resolvable:$true] %s70
      %73 = dma.vmem_to_hbm [thread:$0]  %s69, 128, %s71, [#allocation3]
    $region17: #{tpu_custom_call.1} parent=1 // pred_fallthru
      _
    // Predicated region
    $region18: #{tpu_custom_call.1} parent=1 // pred_check
      _
    $region19: #{tpu_custom_call.1} parent=1 // pred_check_branch
      %75 = sbr.rel (0) target = $region21
    $region20: #{tpu_custom_call.1} parent=1 // pred_region
      %77 = dma.done [#allocation3], 128
    $region21: #{tpu_custom_call.1} parent=1 // pred_fallthru
      _
    %78 = vsyncpa [#allocation3], 1

</llo_original>
